<compile_context>
chip_gen: v7x
topology: tpu7x:2x2x1
jax: 0.10.0
libtpu: 0.0.40
codegen_flags: <defaults>
</compile_context>

<pallas_src>
import jax
import jax.numpy as jnp
from jax.experimental import pallas as pl
from jax.experimental.pallas import tpu as pltpu

EPS = 1e-5
NEG_SLOPE = 0.01  # torch.nn.LeakyReLU default
VMEM_LIMIT = 32 * 1024 * 1024  # safe on v5e (128 MiB), v6e (128 MiB), v7x (64 MiB)


def _stats_kernel(x_ref, w_ref, sum_ref, sq_ref):
    # x_ref:   [Cin,  T]   f32   (one NHW tile of the input)
    # w_ref:   [Cout, Cin] f32   (constant block index -> stays resident in VMEM)
    # sum_ref: [Cout, 1]   f32   per-channel sum(y)      -- VMEM-resident accumulator
    # sq_ref:  [Cout, 1]   f32   per-channel sum(y*y)    -- VMEM-resident accumulator
    @pl.when((pl.program_id(0) == 0) & (pl.program_id(1) == 0))
    def _():
        sum_ref[...] = jnp.zeros_like(sum_ref)
        sq_ref[...] = jnp.zeros_like(sq_ref)

    y = jnp.dot(w_ref[...], x_ref[...], preferred_element_type=jnp.float32)  # [Cout, T]
    sum_ref[...] += jnp.sum(y, axis=1, keepdims=True)
    sq_ref[...] += jnp.sum(y * y, axis=1, keepdims=True)


def _normalize_kernel(x_ref, ws_ref, shift_ref, o_ref):
    # x_ref:     [Cin,  T]   f32
    # ws_ref:    [Cout, Cin] f32   (gamma * inv_std folded into the conv weight rows)
    # shift_ref: [Cout, 1]   f32   (beta - mean * scale)
    # o_ref:     [Cout, T]   f32
    y = jnp.dot(ws_ref[...], x_ref[...], preferred_element_type=jnp.float32)  # [Cout, T]
    z = y + shift_ref[...]
    o_ref[...] = jnp.where(z >= 0, z, NEG_SLOPE * z)


def _pick_tile(hw, target=4096):
    """Largest multiple of 128 that divides hw, capped at `target`; else full hw."""
    if hw % 128 != 0:
        return hw  # full extent: block dim == array dim is always allowed
    t = min((target // 128) * 128, hw)
    while hw % t != 0:
        t -= 128
    return t


def projection_layer(x_nchw, weight, gamma, beta):
    """x_nchw: [N, Cin, H, W]; weight: [Cout, Cin]; gamma/beta: [Cout]."""
    n, cin, h, w_sp = x_nchw.shape
    cout = weight.shape[0]
    hw = h * w_sp
    nhw = n * hw

    x3 = x_nchw.reshape(n, cin, hw).astype(jnp.float32)  # contiguous view, no transpose
    w32 = weight.astype(jnp.float32)

    t = _pick_tile(hw)
    grid = (n, hw // t)

    # ---------------- pass 1: per-channel sum / sum-of-squares of y = W @ x ----------------
    stats_cost = pl.CostEstimate(
        flops=2 * cout * cin * nhw + 4 * cout * nhw,
        transcendentals=0,
        bytes_accessed=(cin * nhw + cout * cin + 2 * cout) * 4,
    )
    y_sum, y_sq = pl.pallas_call(
        _stats_kernel,
        out_shape=(
            jax.ShapeDtypeStruct((cout, 1), jnp.float32),
            jax.ShapeDtypeStruct((cout, 1), jnp.float32),
        ),
        grid=grid,
        in_specs=[
            pl.BlockSpec((None, cin, t), lambda b, i: (b, 0, i)),   # x tile -> kernel sees [Cin, T]
            pl.BlockSpec((cout, cin), lambda b, i: (0, 0)),         # weight, resident
        ],
        out_specs=(
            pl.BlockSpec((cout, 1), lambda b, i: (0, 0)),           # accumulators (constant block)
            pl.BlockSpec((cout, 1), lambda b, i: (0, 0)),
        ),
        compiler_params=pltpu.CompilerParams(
            dimension_semantics=("arbitrary", "arbitrary"),         # reduction across whole grid
            vmem_limit_bytes=VMEM_LIMIT,
        ),
        cost_estimate=stats_cost,
    )(x3, w32)

    # ------------- tiny O(Cout) BN folding in plain JAX (between the two kernels) -----------
    mean = y_sum[:, 0] / nhw
    var = jnp.maximum(y_sq[:, 0] / nhw - mean * mean, 0.0)          # biased (training-mode) variance
    inv_std = jax.lax.rsqrt(var + EPS)
    scale = gamma.astype(jnp.float32) * inv_std
    w_scaled = w32 * scale[:, None]                                  # fold gamma/inv_std into conv weight
    shift = (beta.astype(jnp.float32) - mean * scale).reshape(cout, 1)

    # ---------------- pass 2: out = LeakyReLU(W_scaled @ x + shift) ----------------
    norm_cost = pl.CostEstimate(
        flops=2 * cout * cin * nhw + 3 * cout * nhw,
        transcendentals=0,
        bytes_accessed=((cin + cout) * nhw + cout * cin + cout) * 4,
    )
    out3 = pl.pallas_call(
        _normalize_kernel,
        out_shape=jax.ShapeDtypeStruct((n, cout, hw), jnp.float32),
        grid=grid,
        in_specs=[
            pl.BlockSpec((None, cin, t), lambda b, i: (b, 0, i)),
            pl.BlockSpec((cout, cin), lambda b, i: (0, 0)),
            pl.BlockSpec((cout, 1), lambda b, i: (0, 0)),
        ],
        out_specs=pl.BlockSpec((None, cout, t), lambda b, i: (b, 0, i)),
        compiler_params=pltpu.CompilerParams(
            dimension_semantics=("parallel", "parallel"),   # normalize pass can shard across TCs
            vmem_limit_bytes=VMEM_LIMIT,
        ),
        cost_estimate=norm_cost,
    )(x3, w_scaled, shift)

    return out3.reshape(n, cout, h, w_sp)


if __name__ == "__main__":
    # Small shapes consistent with the module: batch=2, Cin=4, Cout=8, spatial=16x16.
    N, CIN, COUT, H, W = 2, 4, 8, 16, 16

    key = jax.random.PRNGKey(0)
    kx, kw, kg, kb = jax.random.split(key, 4)

    x = jax.random.normal(kx, (N, CIN, H, W), dtype=jnp.float32)
    # Conv2d(input_dim, output_dim, 1, bias=False) weight: [Cout, Cin, 1, 1] -> [Cout, Cin]
    weight = jax.random.normal(kw, (COUT, CIN), dtype=jnp.float32) * 0.5
    # BatchNorm2d affine params (deterministic, non-trivial)
    gamma = 1.0 + 0.1 * jax.random.normal(kg, (COUT,), dtype=jnp.float32)
    beta = 0.1 * jax.random.normal(kb, (COUT,), dtype=jnp.float32)

    out = jax.jit(projection_layer)(x, weight, gamma, beta)
    jax.block_until_ready(out)

    # Pure-JAX reference of the same semantics.
    y = jnp.einsum("oc,nchw->nohw", weight, x)
    mu = y.mean(axis=(0, 2, 3), keepdims=True)
    var = ((y - mu) ** 2).mean(axis=(0, 2, 3), keepdims=True)      # biased variance
    z = gamma[None, :, None, None] * (y - mu) * jax.lax.rsqrt(var + EPS) + beta[None, :, None, None]
    ref = jnp.where(z >= 0, z, NEG_SLOPE * z)

    assert out.shape == ref.shape
    assert jnp.allclose(out, ref, atol=1e-4, rtol=1e-4), float(jnp.max(jnp.abs(out - ref)))

    # TODO(synk): BatchNorm2d running_mean/running_var buffer updates (training side effect,
    # not part of the forward output) are intentionally not implemented.
    print("KERNEL_OK")
</pallas_src>

<mosaic_0001>
module attributes {stable_mosaic.version = 11 : i64} {
  func.func @_stats_kernel(%arg0: i32, %arg1: i32, %arg2: memref<1x4x256xf32, #tpu.memory_space<vmem>>, %arg3: memref<8x4xf32, #tpu.memory_space<vmem>>, %arg4: memref<8x1xf32, #tpu.memory_space<vmem>>, %arg5: memref<8x1xf32, #tpu.memory_space<vmem>>) attributes {dimension_semantics = [#tpu.dimension_semantics<arbitrary>, #tpu.dimension_semantics<arbitrary>], iteration_bounds = array<i64: 2, 1>, scalar_prefetch = 0 : i64, scratch_operands = 0 : i64, tpu.core_type = #tpu.core_type<tc>, window_params = [{transform_indices = @transform_0, window_bounds = array<i64: 1, 4, 256>}, {pipeline_mode = #tpu.pipeline_mode<synchronous>, transform_indices = @transform_1, window_bounds = array<i64: 8, 4>}, {pipeline_mode = #tpu.pipeline_mode<synchronous>, transform_indices = @transform_2, window_bounds = array<i64: 8, 1>}, {pipeline_mode = #tpu.pipeline_mode<synchronous>, transform_indices = @transform_3, window_bounds = array<i64: 8, 1>}]} {
    %c0_i32 = arith.constant 0 : i32
    %0 = arith.cmpi eq, %arg0, %c0_i32 : i32
    %c0_i32_0 = arith.constant 0 : i32
    %1 = arith.cmpi eq, %arg1, %c0_i32_0 : i32
    %2 = arith.andi %0, %1 : i1
    %3 = arith.extui %2 : i1 to i32
    %c0_i32_1 = arith.constant 0 : i32
    %4 = arith.cmpi ne, %3, %c0_i32_1 : i32
    scf.if %4 {
      %cst_16 = arith.constant 0.000000e+00 : f32
      %20 = vector.broadcast %cst_16 : f32 to vector<8x1xf32>
      %c0_17 = arith.constant 0 : index
      %c0_18 = arith.constant 0 : index
      %21 = vector.load %arg4[%c0_17, %c0_18] : memref<8x1xf32, #tpu.memory_space<vmem>>, vector<8x1xf32>
      tpu.vector_store %arg4[%c0_17, %c0_18], %20 {strides = array<i32>} : memref<8x1xf32, #tpu.memory_space<vmem>>, vector<8x1xf32>,
      %cst_19 = arith.constant 0.000000e+00 : f32
      %22 = vector.broadcast %cst_19 : f32 to vector<8x1xf32>
      %c0_20 = arith.constant 0 : index
      %c0_21 = arith.constant 0 : index
      %23 = vector.load %arg5[%c0_20, %c0_21] : memref<8x1xf32, #tpu.memory_space<vmem>>, vector<8x1xf32>
      tpu.vector_store %arg5[%c0_20, %c0_21], %22 {strides = array<i32>} : memref<8x1xf32, #tpu.memory_space<vmem>>, vector<8x1xf32>,
    } else {
    }
    %c0 = arith.constant 0 : index
    %c0_2 = arith.constant 0 : index
    %5 = vector.load %arg3[%c0, %c0_2] : memref<8x4xf32, #tpu.memory_space<vmem>>, vector<8x4xf32>
    %c0_3 = arith.constant 0 : index
    %c0_4 = arith.constant 0 : index
    %c0_5 = arith.constant 0 : index
    %6 = vector.load %arg2[%c0_3, %c0_4, %c0_5] : memref<1x4x256xf32, #tpu.memory_space<vmem>>, vector<1x4x256xf32>
    %7 = vector.shape_cast %6 : vector<1x4x256xf32> to vector<4x256xf32>
    %cst = arith.constant dense<0.000000e+00> : vector<8x256xf32>
    %8 = tpu.matmul %5, %7, %cst {dimension_numbers = #tpu.dot_dimension_numbers<[1], [0], [0], [1], [0, 0, 1, 1], [], []>} : vector<8x4xf32>, vector<4x256xf32>, vector<8x256xf32> -> vector<8x256xf32>
    %c0_6 = arith.constant 0 : index
    %c0_7 = arith.constant 0 : index
    %9 = vector.load %arg4[%c0_6, %c0_7] : memref<8x1xf32, #tpu.memory_space<vmem>>, vector<8x1xf32>
    %cst_8 = arith.constant dense<0.000000e+00> : vector<8xf32>
    %10 = vector.multi_reduction <add>, %8, %cst_8 [1] : vector<8x256xf32> to vector<8xf32>
    %11 = vector.shape_cast %10 : vector<8xf32> to vector<8x1xf32>
    %12 = arith.addf %9, %11 : vector<8x1xf32>
    %c0_9 = arith.constant 0 : index
    %c0_10 = arith.constant 0 : index
    %13 = vector.load %arg4[%c0_9, %c0_10] : memref<8x1xf32, #tpu.memory_space<vmem>>, vector<8x1xf32>
    tpu.vector_store %arg4[%c0_9, %c0_10], %12 {strides = array<i32>} : memref<8x1xf32, #tpu.memory_space<vmem>>, vector<8x1xf32>,
    %c0_11 = arith.constant 0 : index
    %c0_12 = arith.constant 0 : index
    %14 = vector.load %arg5[%c0_11, %c0_12] : memref<8x1xf32, #tpu.memory_space<vmem>>, vector<8x1xf32>
    %15 = arith.mulf %8, %8 : vector<8x256xf32>
    %cst_13 = arith.constant dense<0.000000e+00> : vector<8xf32>
    %16 = vector.multi_reduction <add>, %15, %cst_13 [1] : vector<8x256xf32> to vector<8xf32>
    %17 = vector.shape_cast %16 : vector<8xf32> to vector<8x1xf32>
    %18 = arith.addf %14, %17 : vector<8x1xf32>
    %c0_14 = arith.constant 0 : index
    %c0_15 = arith.constant 0 : index
    %19 = vector.load %arg5[%c0_14, %c0_15] : memref<8x1xf32, #tpu.memory_space<vmem>>, vector<8x1xf32>
    tpu.vector_store %arg5[%c0_14, %c0_15], %18 {strides = array<i32>} : memref<8x1xf32, #tpu.memory_space<vmem>>, vector<8x1xf32>,
    return
  }
  func.func @transform_0(%arg0: i32, %arg1: i32) -> (i32, i32, i32) {
    %c0_i32 = arith.constant 0 : i32
    %c0_i32_0 = arith.constant 0 : i32
    return %arg0, %c0_i32, %arg1 : i32, i32, i32
  }
  func.func @transform_1(%arg0: i32, %arg1: i32) -> (i32, i32) {
    %c0_i32 = arith.constant 0 : i32
    %c0_i32_0 = arith.constant 0 : i32
    %c0_i32_1 = arith.constant 0 : i32
    return %c0_i32, %c0_i32_0 : i32, i32
  }
  func.func @transform_2(%arg0: i32, %arg1: i32) -> (i32, i32) {
    %c0_i32 = arith.constant 0 : i32
    %c0_i32_0 = arith.constant 0 : i32
    %c0_i32_1 = arith.constant 0 : i32
    return %c0_i32, %c0_i32_0 : i32, i32
  }
  func.func @transform_3(%arg0: i32, %arg1: i32) -> (i32, i32) {
    %c0_i32 = arith.constant 0 : i32
    %c0_i32_0 = arith.constant 0 : i32
    %c0_i32_1 = arith.constant 0 : i32
    return %c0_i32, %c0_i32_0 : i32, i32
  }
}

module attributes {stable_mosaic.version = 11 : i64} {
  func.func @_normalize_kernel(%arg0: i32, %arg1: i32, %arg2: memref<1x4x256xf32, #tpu.memory_space<vmem>>, %arg3: memref<8x4xf32, #tpu.memory_space<vmem>>, %arg4: memref<8x1xf32, #tpu.memory_space<vmem>>, %arg5: memref<1x8x256xf32, #tpu.memory_space<vmem>>) attributes {dimension_semantics = [#tpu.dimension_semantics<parallel>, #tpu.dimension_semantics<parallel>], iteration_bounds = array<i64: 2, 1>, scalar_prefetch = 0 : i64, scratch_operands = 0 : i64, tpu.core_type = #tpu.core_type<tc>, window_params = [{transform_indices = @transform_0, window_bounds = array<i64: 1, 4, 256>}, {pipeline_mode = #tpu.pipeline_mode<synchronous>, transform_indices = @transform_1, window_bounds = array<i64: 8, 4>}, {pipeline_mode = #tpu.pipeline_mode<synchronous>, transform_indices = @transform_2, window_bounds = array<i64: 8, 1>}, {transform_indices = @transform_3, window_bounds = array<i64: 1, 8, 256>}]} {
    %c0 = arith.constant 0 : index
    %c0_0 = arith.constant 0 : index
    %0 = vector.load %arg3[%c0, %c0_0] : memref<8x4xf32, #tpu.memory_space<vmem>>, vector<8x4xf32>
    %c0_1 = arith.constant 0 : index
    %c0_2 = arith.constant 0 : index
    %c0_3 = arith.constant 0 : index
    %1 = vector.load %arg2[%c0_1, %c0_2, %c0_3] : memref<1x4x256xf32, #tpu.memory_space<vmem>>, vector<1x4x256xf32>
    %2 = vector.shape_cast %1 : vector<1x4x256xf32> to vector<4x256xf32>
    %cst = arith.constant dense<0.000000e+00> : vector<8x256xf32>
    %3 = tpu.matmul %0, %2, %cst {dimension_numbers = #tpu.dot_dimension_numbers<[1], [0], [0], [1], [0, 0, 1, 1], [], []>} : vector<8x4xf32>, vector<4x256xf32>, vector<8x256xf32> -> vector<8x256xf32>
    %c0_4 = arith.constant 0 : index
    %c0_5 = arith.constant 0 : index
    %4 = vector.load %arg4[%c0_4, %c0_5] : memref<8x1xf32, #tpu.memory_space<vmem>>, vector<8x1xf32>
    %5 = vector.broadcast %4 : vector<8x1xf32> to vector<8x256xf32>
    %6 = arith.addf %3, %5 : vector<8x256xf32>
    %cst_6 = arith.constant 0.000000e+00 : f32
    %7 = vector.broadcast %cst_6 : f32 to vector<8x256xf32>
    %8 = arith.cmpf oge, %6, %7 : vector<8x256xf32>
    %cst_7 = arith.constant 0.00999999977 : f32
    %9 = vector.broadcast %cst_7 : f32 to vector<8x256xf32>
    %10 = arith.mulf %9, %6 : vector<8x256xf32>
    %11 = arith.select %8, %6, %10 : vector<8x256xi1>, vector<8x256xf32>
    %c0_8 = arith.constant 0 : index
    %c0_9 = arith.constant 0 : index
    %c0_10 = arith.constant 0 : index
    %12 = vector.load %arg5[%c0_8, %c0_9, %c0_10] : memref<1x8x256xf32, #tpu.memory_space<vmem>>, vector<1x8x256xf32>
    %13 = vector.shape_cast %12 : vector<1x8x256xf32> to vector<8x256xf32>
    %14 = vector.shape_cast %11 : vector<8x256xf32> to vector<1x8x256xf32>
    tpu.vector_store %arg5[%c0_8, %c0_9, %c0_10], %14 {strides = array<i32>} : memref<1x8x256xf32, #tpu.memory_space<vmem>>, vector<1x8x256xf32>,
    return
  }
  func.func @transform_0(%arg0: i32, %arg1: i32) -> (i32, i32, i32) {
    %c0_i32 = arith.constant 0 : i32
    %c0_i32_0 = arith.constant 0 : i32
    return %arg0, %c0_i32, %arg1 : i32, i32, i32
  }
  func.func @transform_1(%arg0: i32, %arg1: i32) -> (i32, i32) {
    %c0_i32 = arith.constant 0 : i32
    %c0_i32_0 = arith.constant 0 : i32
    %c0_i32_1 = arith.constant 0 : i32
    return %c0_i32, %c0_i32_0 : i32, i32
  }
  func.func @transform_2(%arg0: i32, %arg1: i32) -> (i32, i32) {
    %c0_i32 = arith.constant 0 : i32
    %c0_i32_0 = arith.constant 0 : i32
    %c0_i32_1 = arith.constant 0 : i32
    return %c0_i32, %c0_i32_0 : i32, i32
  }
  func.func @transform_3(%arg0: i32, %arg1: i32) -> (i32, i32, i32) {
    %c0_i32 = arith.constant 0 : i32
    %c0_i32_0 = arith.constant 0 : i32
    return %arg0, %c0_i32, %arg1 : i32, i32, i32
  }
}

</mosaic_0001>

<llo_original>
// kernel: projection_layer.2
$region0: #{projection_layer.2}
  #allocation0 [shape = 'u32[]', space=smem, size = 0x4, offset = 0x4, fixed_abs, tag = 'smem constant byte address 0x4 - core index']
  #allocation1 [shape = 'u32[144,128]{1,0:T(1,128)}', space=vmem, size = 0x12000, scoped, tag = 'internal scratch']
  %s0 = inlined_call_operand.vmem [shape: f32[2,4,256], index: 0, kind: input, shape index: {}]
  %s1 = inlined_call_operand.vmem [shape: f32[8,4], index: 1, kind: input, shape index: {}]
  %s2 = inlined_call_operand.vmem [shape: f32[8,1], index: 2, kind: output, shape index: {0}]
  %s3 = inlined_call_operand.vmem [shape: f32[8,1], index: 3, kind: output, shape index: {1}]
  %4 = xla_tuple %s2, %s3
  %s5 = sld [smem:[#allocation0]]
  $region53: #{projection_layer.2} parent=0
    _
  %s7 = ssub.s32 1, %s5
  %s8 = scalar_select 0, %s7, %s5
  loop: start=0, step=1, limit=4
  $region2: #{projection_layer.2} parent=0 // loop_pre_header
    _
  $region3: #{projection_layer.2} parent=0 // loop_header
    %s10 = sphi 0, %s14
    %p11 = scmp.ge.s32.totalorder %s10, 4
    %s17 = sphi 0, %s29
    %s18 = sphi 0, %s25
    %s19 = sphi 0, %s17
    %s20 = sphi 0, %s18
    %s21 = sphi 0, %s19
    %s22 = sphi 0, %s20
    %s34 = sphi 0, %s36
    %s37 = sphi 0, %s34
    %s38 = sphi 0, %s37
    %s54 = sphi 0, %s38
    %s58 = sphi 0, %s58
    %s60 = sphi 0, %s58
    %s61 = sphi 0, %s60
    %s75 = sphi 0, %s61
    %s79 = sphi 0, %s79
    %s81 = sphi 0, %s79
    %s82 = sphi 0, %s81
    %s96 = sphi 0, %s82
    %s100 = sphi 0, %s100
    %s102 = sphi 0, %s100
    %s103 = sphi 0, %s102
    %s117 = sphi 0, %s103
  $region4: #{projection_layer.2} parent=0 // loop_header_branch
    %13 = sbr.rel (%p11) target = $region8
  $region5: #{projection_layer.2} parent=0 // loop_body
    %s15 = ssub.s32 %s10, 1
    %s16 = ssub.s32 %s10, 2
    %s23 = sadd.s32 1, %s18
    %p24 = scmp.ge.s32.totalorder %s23, 1
    %s25 = scalar_select %p24, 0, %s23
    %s26 = sadd.s32 1, %s17
    %s27 = scalar_select %p24, %s26, %s17
    %p28 = scmp.ge.s32.totalorder %s27, 2
    %s29 = scalar_select %p28, 0, %s27
    %s30 = ssub.s32 %s17, %s29
    %s31 = ssub.s32 %s18, %s25
    %s32 = sor.u32 %s30, %s31
    %p33 = scmp.eq.s32.totalorder %s32, 0
    %s35 = sadd.s32 %s34, 1
    %s36 = scalar_select %p33, %s34, %s35
    %p39 = pneg %p33
    %p40 = scmp.eq.s32.totalorder %s10, 1
    %p41 = por %p39, %p40
    %p42 = scmp.ne.s32.totalorder %s34, %s37
    %p43 = scmp.eq.s32.totalorder %s10, 0
    %p44 = por %p42, %p43
    %p45 = scmp.ne.s32.totalorder %s34, %s37
    %p46 = scmp.eq.s32.totalorder %s15, 1
    %p47 = por %p45, %p46
    %p48 = scmp.ne.s32.totalorder %s37, %s38
    %p49 = scmp.eq.s32.totalorder %s15, 0
    %p50 = por %p48, %p49
    %p51 = scmp.ne.s32.totalorder %s37, %s38
    %p52 = scmp.eq.s32.totalorder %s16, 1
    %p53 = por %p51, %p52
    %p55 = scmp.ne.s32.totalorder %s38, %s54
    %p56 = scmp.eq.s32.totalorder %s16, 0
    %p57 = por %p55, %p56
    %s59 = sadd.s32 %s58, 1
    %p62 = scmp.eq.s32.totalorder %s10, 1
    %p63 = scmp.ne.s32.totalorder %s58, %s60
    %p64 = scmp.eq.s32.totalorder %s10, 0
    %p65 = por %p63, %p64
    %p66 = scmp.ne.s32.totalorder %s58, %s60
    %p67 = scmp.eq.s32.totalorder %s15, 1
    %p68 = por %p66, %p67
    %p69 = scmp.ne.s32.totalorder %s60, %s61
    %p70 = scmp.eq.s32.totalorder %s15, 0
    %p71 = por %p69, %p70
    %p72 = scmp.ne.s32.totalorder %s60, %s61
    %p73 = scmp.eq.s32.totalorder %s16, 1
    %p74 = por %p72, %p73
    %p76 = scmp.ne.s32.totalorder %s61, %s75
    %p77 = scmp.eq.s32.totalorder %s16, 0
    %p78 = por %p76, %p77
    %s80 = sadd.s32 %s79, 1
    %p83 = scmp.eq.s32.totalorder %s10, 1
    %p84 = scmp.ne.s32.totalorder %s79, %s81
    %p85 = scmp.eq.s32.totalorder %s10, 0
    %p86 = por %p84, %p85
    %p87 = scmp.ne.s32.totalorder %s79, %s81
    %p88 = scmp.eq.s32.totalorder %s15, 1
    %p89 = por %p87, %p88
    %p90 = scmp.ne.s32.totalorder %s81, %s82
    %p91 = scmp.eq.s32.totalorder %s15, 0
    %p92 = por %p90, %p91
    %p93 = scmp.ne.s32.totalorder %s81, %s82
    %p94 = scmp.eq.s32.totalorder %s16, 1
    %p95 = por %p93, %p94
    %p97 = scmp.ne.s32.totalorder %s82, %s96
    %p98 = scmp.eq.s32.totalorder %s16, 0
    %p99 = por %p97, %p98
    %s101 = sadd.s32 %s100, 1
    %p104 = scmp.eq.s32.totalorder %s10, 1
    %p105 = scmp.ne.s32.totalorder %s100, %s102
    %p106 = scmp.eq.s32.totalorder %s10, 0
    %p107 = por %p105, %p106
    %p108 = scmp.ne.s32.totalorder %s100, %s102
    %p109 = scmp.eq.s32.totalorder %s15, 1
    %p110 = por %p108, %p109
    %p111 = scmp.ne.s32.totalorder %s102, %s103
    %p112 = scmp.eq.s32.totalorder %s15, 0
    %p113 = por %p111, %p112
    %p114 = scmp.ne.s32.totalorder %s102, %s103
    %p115 = scmp.eq.s32.totalorder %s16, 1
    %p116 = por %p114, %p115
    %p118 = scmp.ne.s32.totalorder %s103, %s117
    %p119 = scmp.eq.s32.totalorder %s16, 0
    %p120 = por %p118, %p119
    %p121 = scmp.le.s32.totalorder 1, %s10
    %p122 = scmp.lt.s32.totalorder %s10, 3
    %p123 = pnand %p121, %p122
    %p124 = pneg %p123
    // Predicated region
    $region9: #{projection_layer.2} parent=5 // pred_check
      _
    $region10: #{projection_layer.2} parent=5 // pred_check_branch
      %126 = sbr.rel (%p123) target = $region12
    $region11: #{projection_layer.2} parent=5 // pred_region
      %s127 = ssub.s32 %s10, 1
      // Predicated region
      $region13: #{projection_layer.2} parent=11 // pred_check
        %p128 = pneg %p71
      $region14: #{projection_layer.2} parent=11 // pred_check_branch
        %130 = sbr.rel (%p128) target = $region16
      $region15: #{projection_layer.2} parent=11 // pred_region
        _
      $region16: #{projection_layer.2} parent=11 // pred_fallthru
        _
    $region12: #{projection_layer.2} parent=5 // pred_fallthru
      _
    %p131 = scmp.lt.s32.totalorder %s10, 2
    // Predicated region
    $region17: #{projection_layer.2} parent=5 // pred_check
      %p132 = pneg %p131
    $region18: #{projection_layer.2} parent=5 // pred_check_branch
      %134 = sbr.rel (%p132) target = $region20
    $region19: #{projection_layer.2} parent=5 // pred_region
      // Predicated region
      $region21: #{projection_layer.2} parent=19 // pred_check
        %p135 = pneg %p44
      $region22: #{projection_layer.2} parent=19 // pred_check_branch
        %137 = sbr.rel (%p135) target = $region24
      $region23: #{projection_layer.2} parent=19 // pred_region
        %s138 = smul.u32 2, %s18
        %p139 = scmp.lt.s32.totalorder %s17, 1
        %s140 = scalar_select %p139, %s17, 1
        %p141 = scmp.lt.s32.totalorder %s138, 1
        %s142 = scalar_select %p141, %s138, 1
        %s143 = smul.addr %s140, 2
        %s144 = sadd.s32 %s142, %s143
        %s145 = smul.addr %s144, 4
        %s146 = scalar_lea.vmem %s0, %s145
        %s147 = smul.u32 2, %s18
      $region24: #{projection_layer.2} parent=19 // pred_fallthru
        _
    $region20: #{projection_layer.2} parent=5 // pred_fallthru
      _
    %p148 = scmp.le.s32.totalorder 1, %s10
    %p149 = scmp.lt.s32.totalorder %s10, 3
    %p150 = pnand %p148, %p149
    %p151 = pneg %p150
    // Predicated region
    $region25: #{projection_layer.2} parent=5 // pred_check
      _
    $region26: #{projection_layer.2} parent=5 // pred_check_branch
      %153 = sbr.rel (%p150) target = $region28
    $region27: #{projection_layer.2} parent=5 // pred_region
      %s154 = ssub.s32 %s10, 1
      %s155 = smul.u32 2, %s20
      %p156 = scmp.lt.s32.totalorder %s19, 1
      %s157 = scalar_select %p156, %s19, 1
      %p158 = scmp.lt.s32.totalorder %s155, 1
      %s159 = scalar_select %p158, %s155, 1
      %s160 = smul.addr %s157, 2
      %s161 = sadd.s32 %s159, %s160
      %s162 = smul.addr %s161, 4
      %s163 = scalar_lea.vmem %s0, %s162
      %p164 = pneg %p50
      %p165 = pneg %p47
      %p166 = pneg %p71
      %p167 = pneg %p68
      %p168 = pneg %p92
      %p169 = pneg %p89
      %p170 = pneg %p113
      %p171 = pneg %p110
      %s172 = smul.u32 2, %s20
      %p173 = scmp.lt.s32.totalorder %s19, 1
      %s174 = scalar_select %p173, %s19, 1
      %p175 = scmp.lt.s32.totalorder %s172, 1
      %s176 = scalar_select %p175, %s172, 1
      %s177 = smul.addr %s174, 2
      %s178 = sadd.s32 %s176, %s177
      %s179 = smul.addr %s178, 4
      %s180 = scalar_lea.vmem %s0, %s179
      %s181 = smul.u32 2, %s20
      %p182 = scmp.eq.s32.totalorder %s19, 0
      %p183 = scmp.eq.s32.totalorder %s20, 0
      %p184 = pnand %p182, %p183
      %p185 = pneg %p184
      // Predicated region
      $region29: #{projection_layer.2} parent=27 // pred_check
        _
      $region30: #{projection_layer.2} parent=27 // pred_check_branch
        %187 = sbr.rel (%p184) target = $region32
      $region31: #{projection_layer.2} parent=27 // pred_region
        %vm188 = vcmask 7168
        %189 = vst.msk [vmem:[%s2] sm:$0xff] %vm188, 0.0
        %190 = vst.msk [vmem:[%s3] sm:$0xff] %vm188, 0.0
      $region32: #{projection_layer.2} parent=27 // pred_fallthru
        _
      %v191 = vld [vmem:[%s1] sm:$0xff]
      %v192 = vld [vmem:[%s180] sm:$0xff]
      %v194 = vcombine.high %v192, %v192
      %vm195 = vcmask 31744
      %v197 = vsel %vm195, %v191, 0
      %vm199 = vcmask 1043456
      %v200 = vsel %vm199, %v192, 0
      %v202 = vsel %vm199, %v194, 0
      %204 = vmatprep.subr.mxu0 %v202
      %205 = vmatpush1.msra.mxu0 %v200
      %206 = vmatprep.subr.mxu0 0.0
      %207 = vmatpush1.msra.mxu0 0.0
      %208 = vmatprep.subr.mxu0 0.0
      %209 = vmatpush1.msra.mxu0 0.0
      %210 = vmatprep.subr.mxu0 0.0
      %211 = vmatpush1.msra.mxu0 0.0
      %212 = vmatprep.subr.mxu0 0.0
      %213 = vmatpush1.msra.mxu0 0.0
      %214 = vmatprep.subr.mxu0 0.0
      %215 = vmatpush1.msra.mxu0 0.0
      %216 = vmatprep.subr.mxu0 0.0
      %217 = vmatpush1.msra.mxu0 0.0
      %218 = vmatprep.subr.mxu0 0.0
      %219 = vmatpush1.msra.mxu0 0.0
      %220 = vmatprep.subr.mxu0 0.0
      %221 = vmatpush1.msra.mxu0 0.0
      %222 = vmatprep.subr.mxu0 0.0
      %223 = vmatpush1.msra.mxu0 0.0
      %224 = vmatprep.subr.mxu0 0.0
      %225 = vmatpush1.msra.mxu0 0.0
      %226 = vmatprep.subr.mxu0 0.0
      %227 = vmatpush1.msra.mxu0 0.0
      %228 = vmatprep.subr.mxu0 0.0
      %229 = vmatpush1.msra.mxu0 0.0
      %230 = vmatprep.subr.mxu0 0.0
      %231 = vmatpush1.msra.mxu0 0.0
      %232 = vmatprep.subr.mxu0 0.0
      %233 = vmatpush1.msra.mxu0 0.0
      %234 = vmatprep.subr.mxu0 0.0
      %235 = vmatpush1.msra.mxu0 0.0
      %236 = vmatprep.subr.mxu0 0.0
      %237 = vmatpush1.msra.mxu0 0.0
      %238 = vmatprep.subr.mxu0 0.0
      %239 = vmatpush1.msra.mxu0 0.0
      %240 = vmatprep.subr.mxu0 0.0
      %241 = vmatpush1.msra.mxu0 0.0
      %242 = vmatprep.subr.mxu0 0.0
      %243 = vmatpush1.msra.mxu0 0.0
      %244 = vmatprep.subr.mxu0 0.0
      %245 = vmatpush1.msra.mxu0 0.0
      %246 = vmatprep.subr.mxu0 0.0
      %247 = vmatpush1.msra.mxu0 0.0
      %248 = vmatprep.subr.mxu0 0.0
      %249 = vmatpush1.msra.mxu0 0.0
      %250 = vmatprep.subr.mxu0 0.0
      %251 = vmatpush1.msra.mxu0 0.0
      %252 = vmatprep.subr.mxu0 0.0
      %253 = vmatpush1.msra.mxu0 0.0
      %254 = vmatprep.subr.mxu0 0.0
      %255 = vmatpush1.msra.mxu0 0.0
      %256 = vmatprep.subr.mxu0 0.0
      %257 = vmatpush1.msra.mxu0 0.0
      %258 = vmatprep.subr.mxu0 0.0
      %259 = vmatpush1.msra.mxu0 0.0
      %260 = vmatprep.subr.mxu0 0.0
      %261 = vmatpush1.msra.mxu0 0.0
      %262 = vmatprep.subr.mxu0 0.0
      %263 = vmatpush1.msra.mxu0 0.0
      %264 = vmatprep.subr.mxu0 0.0
      %265 = vmatpush1.msra.mxu0 0.0
      %266 = vmatprep.subr.mxu0 0.0
      %267 = vmatpush1.msra.mxu0 0.0
      %268 = vmatprep.mubr.f32.mxu0 0.0
      %269 = vmatmul.mubr.f32.gmra.mrb[0].mxu0 %v197
      %v270 = vpop.f32.mrb[0].mxu0
      %v271 = vadd.f32 0.0, %v270
      %v272 = vpop.f32.mrb[0].mxu0
      %v273 = vadd.f32 0.0, %v272
      %274 = vdwg.mxu0
      %v275 = vld [vmem:[%s2] sm:$0xff]
      %v276 = vadd.f32 %v271, %v273
      %277 = vadd.xlane.f32.xlu0 %v276
      %v278 = vpop.xlane.xlu0 %277
      %v279 = vadd.f32 %v275, %v278
      %vm280 = vcmask 7168
      %281 = vst.msk [vmem:[%s2] sm:$0xff] %vm280, %v279
      %v282 = vld [vmem:[%s3] sm:$0xff]
      %v283 = vmul.f32 %v271, %v271
      %v284 = vmul.f32 %v273, %v273
      %v285 = vadd.f32 %v283, %v284
      %286 = vadd.xlane.f32.xlu0 %v285
      %v287 = vpop.xlane.xlu0 %286
      %v288 = vadd.f32 %v282, %v287
      %289 = vst.msk [vmem:[%s3] sm:$0xff] %vm280, %v288
      // Predicated region
      $region33: #{projection_layer.2} parent=27 // pred_check
        %p290 = pneg %p89
      $region34: #{projection_layer.2} parent=27 // pred_check_branch
        %292 = sbr.rel (%p290) target = $region36
      $region35: #{projection_layer.2} parent=27 // pred_region
        _
      $region36: #{projection_layer.2} parent=27 // pred_fallthru
        _
      // Predicated region
      $region37: #{projection_layer.2} parent=27 // pred_check
        %p293 = pneg %p110
      $region38: #{projection_layer.2} parent=27 // pred_check_branch
        %295 = sbr.rel (%p293) target = $region40
      $region39: #{projection_layer.2} parent=27 // pred_region
        _
      $region40: #{projection_layer.2} parent=27 // pred_fallthru
        _
      // Predicated region
      $region41: #{projection_layer.2} parent=27 // pred_check
        %p296 = pneg %p89
      $region42: #{projection_layer.2} parent=27 // pred_check_branch
        %298 = sbr.rel (%p296) target = $region44
      $region43: #{projection_layer.2} parent=27 // pred_region
        _
      $region44: #{projection_layer.2} parent=27 // pred_fallthru
        _
      // Predicated region
      $region45: #{projection_layer.2} parent=27 // pred_check
        %p299 = pneg %p110
      $region46: #{projection_layer.2} parent=27 // pred_check_branch
        %301 = sbr.rel (%p299) target = $region48
      $region47: #{projection_layer.2} parent=27 // pred_region
        _
      $region48: #{projection_layer.2} parent=27 // pred_fallthru
        _
    $region28: #{projection_layer.2} parent=5 // pred_fallthru
      _
    %p302 = scmp.le.s32.totalorder 2, %s10
    // Predicated region
    $region49: #{projection_layer.2} parent=5 // pred_check
      %p303 = pneg %p302
    $region50: #{projection_layer.2} parent=5 // pred_check_branch
      %305 = sbr.rel (%p303) target = $region52
    $region51: #{projection_layer.2} parent=5 // pred_region
      %s306 = ssub.s32 %s10, 2
    $region52: #{projection_layer.2} parent=5 // pred_fallthru
      _
  $region6: #{projection_layer.2} parent=0 // loop_footer
    %s14 = sadd.s32 1, %s10
  $region7: #{projection_layer.2} parent=0 // loop_footer_branch
    %9 = sbr.rel target = $region3
  $region8: #{projection_layer.2} parent=0 // loop_exit
    _

// kernel: projection_layer.3
$region0: #{projection_layer.3}
  #allocation0 [shape = 'u32[]', space=smem, size = 0x4, offset = 0x4, fixed_abs, tag = 'smem constant byte address 0x4 - core index']
  #allocation1 [shape = 'u32[144,128]{1,0:T(1,128)}', space=vmem, size = 0x12000, scoped, tag = 'internal scratch']
  %s0 = inlined_call_operand.vmem [shape: f32[2,4,256], index: 0, kind: input, shape index: {}]
  %s1 = inlined_call_operand.vmem [shape: f32[8,4], index: 1, kind: input, shape index: {}]
  %s2 = inlined_call_operand.vmem [shape: f32[8,1], index: 2, kind: input, shape index: {}]
  %s3 = inlined_call_operand.vmem [shape: f32[2,8,256], index: 3, kind: output, shape index: {}]
  %s4 = sld [smem:[#allocation0]]
  $region45: #{projection_layer.3} parent=0
    _
  %s6 = ssub.s32 1, %s4
  %s7 = scalar_select 0, %s6, %s4
  loop: start=0, step=1, limit=4
  $region2: #{projection_layer.3} parent=0 // loop_pre_header
    _
  $region3: #{projection_layer.3} parent=0 // loop_header
    %s9 = sphi 0, %s13
    %p10 = scmp.ge.s32.totalorder %s9, 4
    %s16 = sphi 0, %s28
    %s17 = sphi 0, %s24
    %s18 = sphi 0, %s16
    %s19 = sphi 0, %s17
    %s20 = sphi 0, %s18
    %s21 = sphi 0, %s19
    %s33 = sphi 0, %s35
    %s36 = sphi 0, %s33
    %s37 = sphi 0, %s36
    %s53 = sphi 0, %s37
    %s57 = sphi 0, %s57
    %s59 = sphi 0, %s57
    %s60 = sphi 0, %s59
    %s74 = sphi 0, %s60
    %s78 = sphi 0, %s78
    %s80 = sphi 0, %s78
    %s81 = sphi 0, %s80
    %s95 = sphi 0, %s81
    %s103 = sphi 0, %s105
    %s106 = sphi 0, %s103
    %s107 = sphi 0, %s106
    %s123 = sphi 0, %s107
  $region4: #{projection_layer.3} parent=0 // loop_header_branch
    %12 = sbr.rel (%p10) target = $region8
  $region5: #{projection_layer.3} parent=0 // loop_body
    %s14 = ssub.s32 %s9, 1
    %s15 = ssub.s32 %s9, 2
    %s22 = sadd.s32 1, %s17
    %p23 = scmp.ge.s32.totalorder %s22, 1
    %s24 = scalar_select %p23, 0, %s22
    %s25 = sadd.s32 1, %s16
    %s26 = scalar_select %p23, %s25, %s16
    %p27 = scmp.ge.s32.totalorder %s26, 2
    %s28 = scalar_select %p27, 0, %s26
    %s29 = ssub.s32 %s16, %s28
    %s30 = ssub.s32 %s17, %s24
    %s31 = sor.u32 %s29, %s30
    %p32 = scmp.eq.s32.totalorder %s31, 0
    %s34 = sadd.s32 %s33, 1
    %s35 = scalar_select %p32, %s33, %s34
    %p38 = pneg %p32
    %p39 = scmp.eq.s32.totalorder %s9, 1
    %p40 = por %p38, %p39
    %p41 = scmp.ne.s32.totalorder %s33, %s36
    %p42 = scmp.eq.s32.totalorder %s9, 0
    %p43 = por %p41, %p42
    %p44 = scmp.ne.s32.totalorder %s33, %s36
    %p45 = scmp.eq.s32.totalorder %s14, 1
    %p46 = por %p44, %p45
    %p47 = scmp.ne.s32.totalorder %s36, %s37
    %p48 = scmp.eq.s32.totalorder %s14, 0
    %p49 = por %p47, %p48
    %p50 = scmp.ne.s32.totalorder %s36, %s37
    %p51 = scmp.eq.s32.totalorder %s15, 1
    %p52 = por %p50, %p51
    %p54 = scmp.ne.s32.totalorder %s37, %s53
    %p55 = scmp.eq.s32.totalorder %s15, 0
    %p56 = por %p54, %p55
    %s58 = sadd.s32 %s57, 1
    %p61 = scmp.eq.s32.totalorder %s9, 1
    %p62 = scmp.ne.s32.totalorder %s57, %s59
    %p63 = scmp.eq.s32.totalorder %s9, 0
    %p64 = por %p62, %p63
    %p65 = scmp.ne.s32.totalorder %s57, %s59
    %p66 = scmp.eq.s32.totalorder %s14, 1
    %p67 = por %p65, %p66
    %p68 = scmp.ne.s32.totalorder %s59, %s60
    %p69 = scmp.eq.s32.totalorder %s14, 0
    %p70 = por %p68, %p69
    %p71 = scmp.ne.s32.totalorder %s59, %s60
    %p72 = scmp.eq.s32.totalorder %s15, 1
    %p73 = por %p71, %p72
    %p75 = scmp.ne.s32.totalorder %s60, %s74
    %p76 = scmp.eq.s32.totalorder %s15, 0
    %p77 = por %p75, %p76
    %s79 = sadd.s32 %s78, 1
    %p82 = scmp.eq.s32.totalorder %s9, 1
    %p83 = scmp.ne.s32.totalorder %s78, %s80
    %p84 = scmp.eq.s32.totalorder %s9, 0
    %p85 = por %p83, %p84
    %p86 = scmp.ne.s32.totalorder %s78, %s80
    %p87 = scmp.eq.s32.totalorder %s14, 1
    %p88 = por %p86, %p87
    %p89 = scmp.ne.s32.totalorder %s80, %s81
    %p90 = scmp.eq.s32.totalorder %s14, 0
    %p91 = por %p89, %p90
    %p92 = scmp.ne.s32.totalorder %s80, %s81
    %p93 = scmp.eq.s32.totalorder %s15, 1
    %p94 = por %p92, %p93
    %p96 = scmp.ne.s32.totalorder %s81, %s95
    %p97 = scmp.eq.s32.totalorder %s15, 0
    %p98 = por %p96, %p97
    %s99 = ssub.s32 %s16, %s28
    %s100 = ssub.s32 %s17, %s24
    %s101 = sor.u32 %s99, %s100
    %p102 = scmp.eq.s32.totalorder %s101, 0
    %s104 = sadd.s32 %s103, 1
    %s105 = scalar_select %p102, %s103, %s104
    %p108 = pneg %p102
    %p109 = scmp.eq.s32.totalorder %s9, 1
    %p110 = por %p108, %p109
    %p111 = scmp.ne.s32.totalorder %s103, %s106
    %p112 = scmp.eq.s32.totalorder %s9, 0
    %p113 = por %p111, %p112
    %p114 = scmp.ne.s32.totalorder %s103, %s106
    %p115 = scmp.eq.s32.totalorder %s14, 1
    %p116 = por %p114, %p115
    %p117 = scmp.ne.s32.totalorder %s106, %s107
    %p118 = scmp.eq.s32.totalorder %s14, 0
    %p119 = por %p117, %p118
    %p120 = scmp.ne.s32.totalorder %s106, %s107
    %p121 = scmp.eq.s32.totalorder %s15, 1
    %p122 = por %p120, %p121
    %p124 = scmp.ne.s32.totalorder %s107, %s123
    %p125 = scmp.eq.s32.totalorder %s15, 0
    %p126 = por %p124, %p125
    %p127 = scmp.le.s32.totalorder 1, %s9
    %p128 = scmp.lt.s32.totalorder %s9, 3
    %p129 = pnand %p127, %p128
    %p130 = pneg %p129
    // Predicated region
    $region9: #{projection_layer.3} parent=5 // pred_check
      _
    $region10: #{projection_layer.3} parent=5 // pred_check_branch
      %132 = sbr.rel (%p129) target = $region12
    $region11: #{projection_layer.3} parent=5 // pred_region
      %s133 = ssub.s32 %s9, 1
      // Predicated region
      $region13: #{projection_layer.3} parent=11 // pred_check
        %p134 = pneg %p70
      $region14: #{projection_layer.3} parent=11 // pred_check_branch
        %136 = sbr.rel (%p134) target = $region16
      $region15: #{projection_layer.3} parent=11 // pred_region
        _
      $region16: #{projection_layer.3} parent=11 // pred_fallthru
        _
      // Predicated region
      $region17: #{projection_layer.3} parent=11 // pred_check
        %p137 = pneg %p91
      $region18: #{projection_layer.3} parent=11 // pred_check_branch
        %139 = sbr.rel (%p137) target = $region20
      $region19: #{projection_layer.3} parent=11 // pred_region
        _
      $region20: #{projection_layer.3} parent=11 // pred_fallthru
        _
    $region12: #{projection_layer.3} parent=5 // pred_fallthru
      _
    %p140 = scmp.lt.s32.totalorder %s9, 2
    // Predicated region
    $region21: #{projection_layer.3} parent=5 // pred_check
      %p141 = pneg %p140
    $region22: #{projection_layer.3} parent=5 // pred_check_branch
      %143 = sbr.rel (%p141) target = $region24
    $region23: #{projection_layer.3} parent=5 // pred_region
      // Predicated region
      $region25: #{projection_layer.3} parent=23 // pred_check
        %p144 = pneg %p43
      $region26: #{projection_layer.3} parent=23 // pred_check_branch
        %146 = sbr.rel (%p144) target = $region28
      $region27: #{projection_layer.3} parent=23 // pred_region
        %s147 = smul.u32 2, %s17
        %p148 = scmp.lt.s32.totalorder %s16, 1
        %s149 = scalar_select %p148, %s16, 1
        %p150 = scmp.lt.s32.totalorder %s147, 1
        %s151 = scalar_select %p150, %s147, 1
        %s152 = smul.addr %s149, 2
        %s153 = sadd.s32 %s151, %s152
        %s154 = smul.addr %s153, 4
        %s155 = scalar_lea.vmem %s0, %s154
        %s156 = smul.u32 2, %s17
      $region28: #{projection_layer.3} parent=23 // pred_fallthru
        _
    $region24: #{projection_layer.3} parent=5 // pred_fallthru
      _
    %p157 = scmp.le.s32.totalorder 1, %s9
    %p158 = scmp.lt.s32.totalorder %s9, 3
    %p159 = pnand %p157, %p158
    %p160 = pneg %p159
    // Predicated region
    $region29: #{projection_layer.3} parent=5 // pred_check
      _
    $region30: #{projection_layer.3} parent=5 // pred_check_branch
      %162 = sbr.rel (%p159) target = $region32
    $region31: #{projection_layer.3} parent=5 // pred_region
      %s163 = ssub.s32 %s9, 1
      %s164 = smul.u32 2, %s19
      %p165 = scmp.lt.s32.totalorder %s18, 1
      %s166 = scalar_select %p165, %s18, 1
      %p167 = scmp.lt.s32.totalorder %s164, 1
      %s168 = scalar_select %p167, %s164, 1
      %s169 = smul.addr %s166, 2
      %s170 = sadd.s32 %s168, %s169
      %s171 = smul.addr %s170, 4
      %s172 = scalar_lea.vmem %s0, %s171
      %p173 = pneg %p49
      %p174 = pneg %p46
      %p175 = pneg %p70
      %p176 = pneg %p67
      %p177 = pneg %p91
      %p178 = pneg %p88
      %p179 = pneg %p119
      %p180 = pneg %p116
      %s181 = smul.u32 2, %s19
      %p182 = scmp.lt.s32.totalorder %s18, 1
      %s183 = scalar_select %p182, %s18, 1
      %p184 = scmp.lt.s32.totalorder %s181, 1
      %s185 = scalar_select %p184, %s181, 1
      %s186 = smul.addr %s183, 2
      %s187 = sadd.s32 %s185, %s186
      %s188 = smul.addr %s187, 8
      %s189 = scalar_lea.vmem %s3, %s188
      %s190 = smul.u32 2, %s19
      %p191 = scmp.lt.s32.totalorder %s18, 1
      %s192 = scalar_select %p191, %s18, 1
      %p193 = scmp.lt.s32.totalorder %s190, 1
      %s194 = scalar_select %p193, %s190, 1
      %s195 = smul.addr %s192, 2
      %s196 = sadd.s32 %s194, %s195
      %s197 = smul.addr %s196, 4
      %s198 = scalar_lea.vmem %s0, %s197
      %s199 = smul.u32 2, %s19
      %s200 = smul.u32 2, %s19
      %p201 = scmp.lt.s32.totalorder %s18, 1
      %s202 = scalar_select %p201, %s18, 1
      %p203 = scmp.lt.s32.totalorder %s200, 1
      %s204 = scalar_select %p203, %s200, 1
      %s205 = smul.addr %s202, 2
      %s206 = sadd.s32 %s204, %s205
      %s207 = smul.addr %s206, 8
      %s208 = scalar_lea.vmem %s3, %s207
      %s209 = smul.u32 2, %s19
      %v210 = vld [vmem:[%s1] sm:$0xff]
      %v211 = vld [vmem:[%s198] sm:$0xff]
      %v212 = vld [vmem:[%s2] sm:$0xff]
      %214 = vset.pattern.permute.xlu0 0
      %215 = vperm.xlu0 %214, %v212
      %v216 = vpop.permute.xlu0 %215
      %v219 = vcombine.high %v211, %v211
      %vm220 = vcmask 31744
      %v222 = vsel %vm220, %v210, 0
      %vm224 = vcmask 1043456
      %v225 = vsel %vm224, %v211, 0
      %v227 = vsel %vm224, %v219, 0
      %229 = vmatprep.subr.mxu0 %v227
      %230 = vmatpush1.msra.mxu0 %v225
      %231 = vmatprep.subr.mxu0 0.0
      %232 = vmatpush1.msra.mxu0 0.0
      %233 = vmatprep.subr.mxu0 0.0
      %234 = vmatpush1.msra.mxu0 0.0
      %235 = vmatprep.subr.mxu0 0.0
      %236 = vmatpush1.msra.mxu0 0.0
      %237 = vmatprep.subr.mxu0 0.0
      %238 = vmatpush1.msra.mxu0 0.0
      %239 = vmatprep.subr.mxu0 0.0
      %240 = vmatpush1.msra.mxu0 0.0
      %241 = vmatprep.subr.mxu0 0.0
      %242 = vmatpush1.msra.mxu0 0.0
      %243 = vmatprep.subr.mxu0 0.0
      %244 = vmatpush1.msra.mxu0 0.0
      %245 = vmatprep.subr.mxu0 0.0
      %246 = vmatpush1.msra.mxu0 0.0
      %247 = vmatprep.subr.mxu0 0.0
      %248 = vmatpush1.msra.mxu0 0.0
      %249 = vmatprep.subr.mxu0 0.0
      %250 = vmatpush1.msra.mxu0 0.0
      %251 = vmatprep.subr.mxu0 0.0
      %252 = vmatpush1.msra.mxu0 0.0
      %253 = vmatprep.subr.mxu0 0.0
      %254 = vmatpush1.msra.mxu0 0.0
      %255 = vmatprep.subr.mxu0 0.0
      %256 = vmatpush1.msra.mxu0 0.0
      %257 = vmatprep.subr.mxu0 0.0
      %258 = vmatpush1.msra.mxu0 0.0
      %259 = vmatprep.subr.mxu0 0.0
      %260 = vmatpush1.msra.mxu0 0.0
      %261 = vmatprep.subr.mxu0 0.0
      %262 = vmatpush1.msra.mxu0 0.0
      %263 = vmatprep.subr.mxu0 0.0
      %264 = vmatpush1.msra.mxu0 0.0
      %265 = vmatprep.subr.mxu0 0.0
      %266 = vmatpush1.msra.mxu0 0.0
      %267 = vmatprep.subr.mxu0 0.0
      %268 = vmatpush1.msra.mxu0 0.0
      %269 = vmatprep.subr.mxu0 0.0
      %270 = vmatpush1.msra.mxu0 0.0
      %271 = vmatprep.subr.mxu0 0.0
      %272 = vmatpush1.msra.mxu0 0.0
      %273 = vmatprep.subr.mxu0 0.0
      %274 = vmatpush1.msra.mxu0 0.0
      %275 = vmatprep.subr.mxu0 0.0
      %276 = vmatpush1.msra.mxu0 0.0
      %277 = vmatprep.subr.mxu0 0.0
      %278 = vmatpush1.msra.mxu0 0.0
      %279 = vmatprep.subr.mxu0 0.0
      %280 = vmatpush1.msra.mxu0 0.0
      %281 = vmatprep.subr.mxu0 0.0
      %282 = vmatpush1.msra.mxu0 0.0
      %283 = vmatprep.subr.mxu0 0.0
      %284 = vmatpush1.msra.mxu0 0.0
      %285 = vmatprep.subr.mxu0 0.0
      %286 = vmatpush1.msra.mxu0 0.0
      %287 = vmatprep.subr.mxu0 0.0
      %288 = vmatpush1.msra.mxu0 0.0
      %289 = vmatprep.subr.mxu0 0.0
      %290 = vmatpush1.msra.mxu0 0.0
      %291 = vmatprep.subr.mxu0 0.0
      %292 = vmatpush1.msra.mxu0 0.0
      %293 = vmatprep.mubr.f32.mxu0 0.0
      %294 = vmatmul.mubr.f32.gmra.mrb[0].mxu0 %v222
      %v295 = vpop.f32.mrb[0].mxu0
      %v296 = vadd.f32 %v216, %v295
      %v297 = vpop.f32.mrb[0].mxu0
      %v298 = vadd.f32 %v216, %v297
      %299 = vdwg.mxu0
      %vm300 = vcmp.ge.f32.partialorder %v296, 0.0
      %vm301 = vcmp.ge.f32.partialorder %v298, 0.0
      %v302 = vmul.f32 %v296, 0.01
      %v303 = vmul.f32 %v298, 0.01
      %v304 = vsel %vm300, %v296, %v302
      %v305 = vsel %vm301, %v298, %v303
      %306 = vst [vmem:[%s208] sm:$0xff] %v304
      %307 = vst [vmem:[%s208 + $0x8] sm:$0xff] %v305
      %s308 = smul.u32 2, %s19
      %p309 = scmp.lt.s32.totalorder %s18, 1
      %s310 = scalar_select %p309, %s18, 1
      %p311 = scmp.lt.s32.totalorder %s308, 1
      %s312 = scalar_select %p311, %s308, 1
      %s313 = smul.addr %s310, 2
      %s314 = sadd.s32 %s312, %s313
      %s315 = smul.addr %s314, 8
      %s316 = scalar_lea.vmem %s3, %s315
      // Predicated region
      $region33: #{projection_layer.3} parent=31 // pred_check
        %p317 = pneg %p116
      $region34: #{projection_layer.3} parent=31 // pred_check_branch
        %319 = sbr.rel (%p317) target = $region36
      $region35: #{projection_layer.3} parent=31 // pred_region
        %s320 = smul.u32 2, %s19
      $region36: #{projection_layer.3} parent=31 // pred_fallthru
        _
    $region32: #{projection_layer.3} parent=5 // pred_fallthru
      _
    %p321 = scmp.le.s32.totalorder 2, %s9
    // Predicated region
    $region37: #{projection_layer.3} parent=5 // pred_check
      %p322 = pneg %p321
    $region38: #{projection_layer.3} parent=5 // pred_check_branch
      %324 = sbr.rel (%p322) target = $region40
    $region39: #{projection_layer.3} parent=5 // pred_region
      %s325 = ssub.s32 %s9, 2
      // Predicated region
      $region41: #{projection_layer.3} parent=39 // pred_check
        %p326 = pneg %p122
      $region42: #{projection_layer.3} parent=39 // pred_check_branch
        %328 = sbr.rel (%p326) target = $region44
      $region43: #{projection_layer.3} parent=39 // pred_region
        %s329 = smul.u32 2, %s21
        %p330 = scmp.lt.s32.totalorder %s20, 1
        %s331 = scalar_select %p330, %s20, 1
        %p332 = scmp.lt.s32.totalorder %s329, 1
        %s333 = scalar_select %p332, %s329, 1
        %s334 = smul.addr %s331, 2
        %s335 = sadd.s32 %s333, %s334
        %s336 = smul.addr %s335, 8
        %s337 = scalar_lea.vmem %s3, %s336
      $region44: #{projection_layer.3} parent=39 // pred_fallthru
        _
    $region40: #{projection_layer.3} parent=5 // pred_fallthru
      _
  $region6: #{projection_layer.3} parent=0 // loop_footer
    %s13 = sadd.s32 1, %s9
  $region7: #{projection_layer.3} parent=0 // loop_footer_branch
    %8 = sbr.rel target = $region3
  $region8: #{projection_layer.3} parent=0 // loop_exit
    _

</llo_original>
